<compile_context>
chip_gen: v5e
topology: v5e:2x2
jax: 0.10.0
libtpu: 0.0.40
codegen_flags: <defaults>
</compile_context>

<pallas_src>
import functools

import jax
import jax.numpy as jnp
from jax.experimental import pallas as pl
from jax.experimental.pallas import tpu as pltpu


def _conv3x3_bn_relu_kernel(x_ref, w_ref, shift_ref, o_ref, *, tm, rs):
    # x_ref:     (P, 3*Cin)      bf16  kx-folded, flattened padded image (one batch elem)
    # w_ref:     (3, 3*Cin, tn)  bf16  per-ky weight slabs, BN scale pre-folded
    # shift_ref: (1, tn)         f32   beta - mean * scale   (BN folded)
    # o_ref:     (tm, tn)        bf16  output tile (flattened spatial rows x channels)
    m = pl.program_id(2)
    base = pl.multiple_of(m * tm, tm)
    acc = None
    for ky in range(3):                                   # static unroll: 3 MXU passes
        start = pl.multiple_of(base + ky * rs, 16)        # sublane-tile aligned slice
        lhs = x_ref[pl.ds(start, tm), :]                  # (tm, 3*Cin) contiguous rows
        part = jnp.dot(lhs, w_ref[ky], preferred_element_type=jnp.float32)
        acc = part if acc is None else acc + part
    y = acc + shift_ref[...]
    o_ref[...] = jnp.maximum(y, 0.0).astype(o_ref.dtype)


def conv_bn_relu(x_nchw, weight, gamma, beta, running_mean, running_var, eps=1e-5):
    """x_nchw: (N, Cin, H, W) f32; weight: (Cout, Cin, 3, 3) f32. Returns NCHW f32."""
    N, Cin, H, W = x_nchw.shape
    Cout, Cin_w, Kh, Kw = weight.shape
    assert (Kh, Kw) == (3, 3) and Cin_w == Cin, "kernel implements k=3, s=1, p=1, groups=1"

    def rup(a, b):
        return (a + b - 1) // b * b

    rs = rup(W + 2, 16)                     # padded row stride, sublane-aligned for bf16
    Mq = H * rs                             # flattened output rows (incl. garbage cols)
    tn = 128                                # MXU-native N tile (v5e native; fine on v6e/v7x)
    tm = 256 if Mq >= 256 else rup(Mq, 16)  # TODO(synk): sweep tm (256..1024) per generation
    Mq_pad = rup(Mq, tm)
    P = Mq_pad + 2 * rs                     # rows the kernel may read (ky shifts up to 2*rs)
    need_flat = P + 2                       # flattened padded rows needed (kx fold reads +2)
    R = -(-need_flat // rs)                 # total padded image rows
    pad_bottom = R - 1 - H
    pad_right = rs - 1 - W
    cout_pad = rup(Cout, 128)               # lane-dense output store / native MXU N dim

    # ---- glue: NCHW -> padded NHWC -> flatten -> fold kx taps into channels, bf16 ----
    x = jnp.transpose(x_nchw, (0, 2, 3, 1))                              # (N,H,W,Cin)
    xp = jnp.pad(x, ((0, 0), (1, pad_bottom), (1, pad_right), (0, 0)))   # (N,R,rs,Cin)
    xf = xp.reshape(N, R * rs, Cin)
    # x3[n, p, kx*Cin:(kx+1)*Cin] == padded pixel at flattened index p + kx  (kx fold)
    x3 = jnp.concatenate([xf[:, k:k + P, :] for k in range(3)], axis=-1)
    x3 = x3.astype(jnp.bfloat16)                                         # (N, P, 3*Cin)

    # weights: (Cout,Cin,3,3) -> (ky, kx*Cin, Cout); fold BN scale; pad Cout; cast bf16
    scale = gamma / jnp.sqrt(running_var + eps)
    shift = beta - running_mean * scale
    w = jnp.transpose(weight, (2, 3, 1, 0)).reshape(3, 3 * Cin, Cout)
    w = w * scale[None, None, :]
    w = jnp.pad(w, ((0, 0), (0, 0), (0, cout_pad - Cout))).astype(jnp.bfloat16)
    shift = jnp.pad(shift, (0, cout_pad - Cout)).reshape(1, cout_pad).astype(jnp.float32)

    grid = (N, cout_pad // tn, Mq_pad // tm)   # (n, co, m): x / weights change only on outer axes

    # VMEM working set (double-buffered) -> vmem_limit; keep below v7x's 64 MiB physical VMEM.
    x3_vmem = rup(P, 16) * rup(3 * Cin, 128) * 2
    w_vmem = 3 * rup(3 * Cin, 16) * tn * 2
    o_vmem = tm * tn * 2
    vmem_need = 2 * (x3_vmem + w_vmem + o_vmem + 8 * tn * 4) + (2 << 20)
    assert vmem_need <= (48 << 20), (
        f"working set ({vmem_need >> 20} MiB) too large; needs an H-block axis with halo DMA")
    vmem_limit = int(min(max(vmem_need, 32 << 20), 48 << 20))

    flops = 2 * N * Mq_pad * (9 * Cin) * cout_pad
    bytes_accessed = (N * P * 3 * Cin * 2                          # bf16 kx-folded input, once per n
                      + N * (cout_pad // tn) * 9 * Cin * tn * 2    # bf16 weights, per (n, co)
                      + N * Mq_pad * cout_pad * 2)                 # bf16 output

    kernel = functools.partial(_conv3x3_bn_relu_kernel, tm=tm, rs=rs)

    out_flat = pl.pallas_call(
        kernel,
        out_shape=jax.ShapeDtypeStruct((N, Mq_pad, cout_pad), jnp.bfloat16),
        grid_spec=pltpu.PrefetchScalarGridSpec(
            num_scalar_prefetch=0,
            grid=grid,
            in_specs=[
                pl.BlockSpec((None, P, 3 * Cin), lambda n, co, m: (n, 0, 0)),
                pl.BlockSpec((3, 3 * Cin, tn), lambda n, co, m: (0, 0, co)),
                pl.BlockSpec((1, tn), lambda n, co, m: (0, co)),
            ],
            out_specs=pl.BlockSpec((None, tm, tn), lambda n, co, m: (n, m, co)),
        ),
        compiler_params=pltpu.CompilerParams(
            dimension_semantics=("parallel", "parallel", "parallel"),
            vmem_limit_bytes=vmem_limit),
        cost_estimate=pl.CostEstimate(flops=flops, transcendentals=0,
                                      bytes_accessed=bytes_accessed),
    )(x3, w, shift)

    # ---- glue: drop spatial / channel padding, back to NCHW f32 ----
    out = out_flat[:, :Mq, :Cout].reshape(N, H, rs, Cout)[:, :, :W, :]
    return jnp.transpose(out, (0, 3, 1, 2)).astype(jnp.float32)


if __name__ == "__main__":
    key = jax.random.PRNGKey(0)
    k_x, k_w, k_g, k_b, k_m, k_v = jax.random.split(key, 6)

    N, Cin, H, W = 2, 4, 16, 16
    Cout, K = 8, 3

    x = jax.random.normal(k_x, (N, Cin, H, W), dtype=jnp.float32)
    weight = jax.random.normal(k_w, (Cout, Cin, K, K), dtype=jnp.float32) * 0.1
    gamma = jax.random.normal(k_g, (Cout,), dtype=jnp.float32) * 0.1 + 1.0
    beta = jax.random.normal(k_b, (Cout,), dtype=jnp.float32) * 0.1
    running_mean = jax.random.normal(k_m, (Cout,), dtype=jnp.float32) * 0.1
    running_var = jnp.abs(jax.random.normal(k_v, (Cout,), dtype=jnp.float32)) + 0.5

    fn = jax.jit(conv_bn_relu)
    out = jax.block_until_ready(fn(x, weight, gamma, beta, running_mean, running_var))

    # reference (plain JAX, f32)
    ref_conv = jax.lax.conv_general_dilated(
        x, weight, window_strides=(1, 1), padding=((1, 1), (1, 1)),
        dimension_numbers=("NCHW", "OIHW", "NCHW"))
    eps = 1e-5
    s = (gamma / jnp.sqrt(running_var + eps)).reshape(1, Cout, 1, 1)
    b = (beta - running_mean * gamma / jnp.sqrt(running_var + eps)).reshape(1, Cout, 1, 1)
    ref = jnp.maximum(ref_conv * s + b, 0.0)

    assert out.shape == (N, Cout, H, W)
    # bf16 MXU operands + bf16 output storage (f32 accumulation) -> loosened tolerance.
    assert jnp.allclose(out, ref, atol=5e-2, rtol=5e-2), "mismatch vs reference"
    print("KERNEL_OK")
</pallas_src>

<mosaic_0001>
module attributes {stable_mosaic.version = 11 : i64} {
  func.func @_conv3x3_bn_relu_kernel(%arg0: i32, %arg1: i32, %arg2: i32, %arg3: memref<1x576x12xbf16, #tpu.memory_space<vmem>>, %arg4: memref<3x12x128xbf16, #tpu.memory_space<vmem>>, %arg5: memref<1x128xf32, #tpu.memory_space<vmem>>, %arg6: memref<1x256x128xbf16, #tpu.memory_space<vmem>>) attributes {dimension_semantics = [#tpu.dimension_semantics<parallel>, #tpu.dimension_semantics<parallel>, #tpu.dimension_semantics<parallel>], iteration_bounds = array<i64: 2, 1, 2>, scalar_prefetch = 0 : i64, scratch_operands = 0 : i64, tpu.core_type = #tpu.core_type<tc>, window_params = [{transform_indices = @transform_0, window_bounds = array<i64: 1, 576, 12>}, {transform_indices = @transform_1, window_bounds = array<i64: 3, 12, 128>}, {transform_indices = @transform_2, window_bounds = array<i64: 1, 128>}, {transform_indices = @transform_3, window_bounds = array<i64: 1, 256, 128>}]} {
    %c256_i32 = arith.constant 256 : i32
    %0 = arith.muli %arg2, %c256_i32 : i32
    %1 = tpu.assume_multiple %0, 256 : i32
    %c0_i32 = arith.constant 0 : i32
    %2 = arith.addi %1, %c0_i32 : i32
    %3 = tpu.assume_multiple %2, 16 : i32
    %c0 = arith.constant 0 : index
    %4 = arith.index_cast %3 : i32 to index
    %c0_0 = arith.constant 0 : index
    %5 = vector.load %arg3[%c0, %4, %c0_0] : memref<1x576x12xbf16, #tpu.memory_space<vmem>>, vector<1x256x12xbf16>
    %6 = vector.shape_cast %5 : vector<1x256x12xbf16> to vector<256x12xbf16>
    %c0_1 = arith.constant 0 : index
    %c0_2 = arith.constant 0 : index
    %c0_3 = arith.constant 0 : index
    %7 = vector.load %arg4[%c0_1, %c0_2, %c0_3] : memref<3x12x128xbf16, #tpu.memory_space<vmem>>, vector<1x12x128xbf16>
    %8 = vector.shape_cast %7 : vector<1x12x128xbf16> to vector<12x128xbf16>
    %cst = arith.constant dense<0.000000e+00> : vector<256x128xf32>
    %9 = tpu.matmul %6, %8, %cst {dimension_numbers = #tpu.dot_dimension_numbers<[1], [0], [0], [1], [0, 0, 1, 1], [], []>} : vector<256x12xbf16>, vector<12x128xbf16>, vector<256x128xf32> -> vector<256x128xf32>
    %c32_i32 = arith.constant 32 : i32
    %10 = arith.addi %1, %c32_i32 : i32
    %11 = tpu.assume_multiple %10, 16 : i32
    %c0_4 = arith.constant 0 : index
    %12 = arith.index_cast %11 : i32 to index
    %c0_5 = arith.constant 0 : index
    %13 = vector.load %arg3[%c0_4, %12, %c0_5] : memref<1x576x12xbf16, #tpu.memory_space<vmem>>, vector<1x256x12xbf16>
    %14 = vector.shape_cast %13 : vector<1x256x12xbf16> to vector<256x12xbf16>
    %c1 = arith.constant 1 : index
    %c0_6 = arith.constant 0 : index
    %c0_7 = arith.constant 0 : index
    %15 = vector.load %arg4[%c1, %c0_6, %c0_7] : memref<3x12x128xbf16, #tpu.memory_space<vmem>>, vector<1x12x128xbf16>
    %16 = vector.shape_cast %15 : vector<1x12x128xbf16> to vector<12x128xbf16>
    %cst_8 = arith.constant dense<0.000000e+00> : vector<256x128xf32>
    %17 = tpu.matmul %14, %16, %cst_8 {dimension_numbers = #tpu.dot_dimension_numbers<[1], [0], [0], [1], [0, 0, 1, 1], [], []>} : vector<256x12xbf16>, vector<12x128xbf16>, vector<256x128xf32> -> vector<256x128xf32>
    %18 = arith.addf %9, %17 : vector<256x128xf32>
    %c64_i32 = arith.constant 64 : i32
    %19 = arith.addi %1, %c64_i32 : i32
    %20 = tpu.assume_multiple %19, 16 : i32
    %c0_9 = arith.constant 0 : index
    %21 = arith.index_cast %20 : i32 to index
    %c0_10 = arith.constant 0 : index
    %22 = vector.load %arg3[%c0_9, %21, %c0_10] : memref<1x576x12xbf16, #tpu.memory_space<vmem>>, vector<1x256x12xbf16>
    %23 = vector.shape_cast %22 : vector<1x256x12xbf16> to vector<256x12xbf16>
    %c2 = arith.constant 2 : index
    %c0_11 = arith.constant 0 : index
    %c0_12 = arith.constant 0 : index
    %24 = vector.load %arg4[%c2, %c0_11, %c0_12] : memref<3x12x128xbf16, #tpu.memory_space<vmem>>, vector<1x12x128xbf16>
    %25 = vector.shape_cast %24 : vector<1x12x128xbf16> to vector<12x128xbf16>
    %cst_13 = arith.constant dense<0.000000e+00> : vector<256x128xf32>
    %26 = tpu.matmul %23, %25, %cst_13 {dimension_numbers = #tpu.dot_dimension_numbers<[1], [0], [0], [1], [0, 0, 1, 1], [], []>} : vector<256x12xbf16>, vector<12x128xbf16>, vector<256x128xf32> -> vector<256x128xf32>
    %27 = arith.addf %18, %26 : vector<256x128xf32>
    %c0_14 = arith.constant 0 : index
    %c0_15 = arith.constant 0 : index
    %28 = vector.load %arg5[%c0_14, %c0_15] : memref<1x128xf32, #tpu.memory_space<vmem>>, vector<1x128xf32>
    %29 = vector.broadcast %28 : vector<1x128xf32> to vector<256x128xf32>
    %30 = arith.addf %27, %29 : vector<256x128xf32>
    %cst_16 = arith.constant 0.000000e+00 : f32
    %31 = vector.broadcast %cst_16 : f32 to vector<256x128xf32>
    %32 = arith.maximumf %30, %31 : vector<256x128xf32>
    %33 = arith.truncf %32 : vector<256x128xf32> to vector<256x128xbf16>
    %c0_17 = arith.constant 0 : index
    %c0_18 = arith.constant 0 : index
    %c0_19 = arith.constant 0 : index
    %34 = vector.load %arg6[%c0_17, %c0_18, %c0_19] : memref<1x256x128xbf16, #tpu.memory_space<vmem>>, vector<1x256x128xbf16>
    %35 = vector.shape_cast %34 : vector<1x256x128xbf16> to vector<256x128xbf16>
    %36 = vector.shape_cast %33 : vector<256x128xbf16> to vector<1x256x128xbf16>
    tpu.vector_store %arg6[%c0_17, %c0_18, %c0_19], %36 {strides = array<i32>} : memref<1x256x128xbf16, #tpu.memory_space<vmem>>, vector<1x256x128xbf16>,
    return
  }
  func.func @transform_0(%arg0: i32, %arg1: i32, %arg2: i32) -> (i32, i32, i32) {
    %c0_i32 = arith.constant 0 : i32
    %c0_i32_0 = arith.constant 0 : i32
    %c0_i32_1 = arith.constant 0 : i32
    return %arg0, %c0_i32, %c0_i32_0 : i32, i32, i32
  }
  func.func @transform_1(%arg0: i32, %arg1: i32, %arg2: i32) -> (i32, i32, i32) {
    %c0_i32 = arith.constant 0 : i32
    %c0_i32_0 = arith.constant 0 : i32
    %c0_i32_1 = arith.constant 0 : i32
    return %c0_i32, %c0_i32_0, %arg1 : i32, i32, i32
  }
  func.func @transform_2(%arg0: i32, %arg1: i32, %arg2: i32) -> (i32, i32) {
    %c0_i32 = arith.constant 0 : i32
    %c0_i32_0 = arith.constant 0 : i32
    return %c0_i32, %arg1 : i32, i32
  }
  func.func @transform_3(%arg0: i32, %arg1: i32, %arg2: i32) -> (i32, i32, i32) {
    %c0_i32 = arith.constant 0 : i32
    return %arg0, %arg2, %arg1 : i32, i32, i32
  }
}

</mosaic_0001>

<llo_original>
// kernel: conv_bn_relu.1
$region0: #{conv_bn_relu.1}
  #allocation0 [shape = 'u32[]', space=smem, size = 0x4, offset = 0x4, fixed_abs, tag = 'smem constant byte address 0x4 - core index']
  #allocation1 [shape = 'u32[72,128]{1,0:T(1,128)}', space=vmem, size = 0x9000, scoped, tag = 'internal scratch']
  %s0 = inlined_call_operand.vmem [shape: bf16[2,576,12], index: 0, kind: input, shape index: {}]
  %s1 = inlined_call_operand.vmem [shape: bf16[3,12,128], index: 1, kind: input, shape index: {}]
  %s2 = inlined_call_operand.vmem [shape: f32[1,128], index: 2, kind: input, shape index: {}]
  %s3 = inlined_call_operand.vmem [shape: bf16[2,512,128], index: 3, kind: output, shape index: {}]
  %s4 = sld [smem:[#allocation0]]
  $region45: #{conv_bn_relu.1} parent=0
    _
  %s6 = ssub.s32 1, %s4
  %s7 = scalar_select 0, %s6, %s4
  loop: start=0, step=1, limit=6
  $region2: #{conv_bn_relu.1} parent=0 // loop_pre_header
    _
  $region3: #{conv_bn_relu.1} parent=0 // loop_header
    %s9 = sphi 0, %s13
    %p10 = scmp.ge.s32.totalorder %s9, 6
    %s16 = sphi 0, %s35
    %s17 = sphi 0, %s31
    %s18 = sphi 0, %s27
    %s19 = sphi 0, %s16
    %s20 = sphi 0, %s17
    %s21 = sphi 0, %s18
    %s22 = sphi 0, %s19
    %s23 = sphi 0, %s20
    %s24 = sphi 0, %s21
    %s38 = sphi 0, %s40
    %s41 = sphi 0, %s38
    %s42 = sphi 0, %s41
    %s58 = sphi 0, %s42
    %s64 = sphi 0, %s66
    %s67 = sphi 0, %s64
    %s68 = sphi 0, %s67
    %s84 = sphi 0, %s68
    %s90 = sphi 0, %s92
    %s93 = sphi 0, %s90
    %s94 = sphi 0, %s93
    %s110 = sphi 0, %s94
    %s120 = sphi 0, %s122
    %s123 = sphi 0, %s120
    %s124 = sphi 0, %s123
    %s140 = sphi 0, %s124
  $region4: #{conv_bn_relu.1} parent=0 // loop_header_branch
    %12 = sbr.rel (%p10) target = $region8
  $region5: #{conv_bn_relu.1} parent=0 // loop_body
    %s14 = ssub.s32 %s9, 1
    %s15 = ssub.s32 %s9, 2
    %s25 = sadd.s32 1, %s18
    %p26 = scmp.ge.s32.totalorder %s25, 2
    %s27 = scalar_select %p26, 0, %s25
    %s28 = sadd.s32 1, %s17
    %s29 = scalar_select %p26, %s28, %s17
    %p30 = scmp.ge.s32.totalorder %s29, 1
    %s31 = scalar_select %p30, 0, %s29
    %s32 = sadd.s32 1, %s16
    %s33 = scalar_select %p30, %s32, %s16
    %p34 = scmp.ge.s32.totalorder %s33, 2
    %s35 = scalar_select %p34, 0, %s33
    %s36 = ssub.s32 %s16, %s35
    %p37 = scmp.eq.s32.totalorder %s36, 0
    %s39 = sadd.s32 %s38, 1
    %s40 = scalar_select %p37, %s38, %s39
    %p43 = pneg %p37
    %p44 = scmp.eq.s32.totalorder %s9, 3
    %p45 = por %p43, %p44
    %p46 = scmp.ne.s32.totalorder %s38, %s41
    %p47 = scmp.eq.s32.totalorder %s9, 0
    %p48 = por %p46, %p47
    %p49 = scmp.ne.s32.totalorder %s38, %s41
    %p50 = scmp.eq.s32.totalorder %s14, 3
    %p51 = por %p49, %p50
    %p52 = scmp.ne.s32.totalorder %s41, %s42
    %p53 = scmp.eq.s32.totalorder %s14, 0
    %p54 = por %p52, %p53
    %p55 = scmp.ne.s32.totalorder %s41, %s42
    %p56 = scmp.eq.s32.totalorder %s15, 3
    %p57 = por %p55, %p56
    %p59 = scmp.ne.s32.totalorder %s42, %s58
    %p60 = scmp.eq.s32.totalorder %s15, 0
    %p61 = por %p59, %p60
    %s62 = ssub.s32 %s17, %s31
    %p63 = scmp.eq.s32.totalorder %s62, 0
    %s65 = sadd.s32 %s64, 1
    %s66 = scalar_select %p63, %s64, %s65
    %p69 = pneg %p63
    %p70 = scmp.eq.s32.totalorder %s9, 3
    %p71 = por %p69, %p70
    %p72 = scmp.ne.s32.totalorder %s64, %s67
    %p73 = scmp.eq.s32.totalorder %s9, 0
    %p74 = por %p72, %p73
    %p75 = scmp.ne.s32.totalorder %s64, %s67
    %p76 = scmp.eq.s32.totalorder %s14, 3
    %p77 = por %p75, %p76
    %p78 = scmp.ne.s32.totalorder %s67, %s68
    %p79 = scmp.eq.s32.totalorder %s14, 0
    %p80 = por %p78, %p79
    %p81 = scmp.ne.s32.totalorder %s67, %s68
    %p82 = scmp.eq.s32.totalorder %s15, 3
    %p83 = por %p81, %p82
    %p85 = scmp.ne.s32.totalorder %s68, %s84
    %p86 = scmp.eq.s32.totalorder %s15, 0
    %p87 = por %p85, %p86
    %s88 = ssub.s32 %s17, %s31
    %p89 = scmp.eq.s32.totalorder %s88, 0
    %s91 = sadd.s32 %s90, 1
    %s92 = scalar_select %p89, %s90, %s91
    %p95 = pneg %p89
    %p96 = scmp.eq.s32.totalorder %s9, 3
    %p97 = por %p95, %p96
    %p98 = scmp.ne.s32.totalorder %s90, %s93
    %p99 = scmp.eq.s32.totalorder %s9, 0
    %p100 = por %p98, %p99
    %p101 = scmp.ne.s32.totalorder %s90, %s93
    %p102 = scmp.eq.s32.totalorder %s14, 3
    %p103 = por %p101, %p102
    %p104 = scmp.ne.s32.totalorder %s93, %s94
    %p105 = scmp.eq.s32.totalorder %s14, 0
    %p106 = por %p104, %p105
    %p107 = scmp.ne.s32.totalorder %s93, %s94
    %p108 = scmp.eq.s32.totalorder %s15, 3
    %p109 = por %p107, %p108
    %p111 = scmp.ne.s32.totalorder %s94, %s110
    %p112 = scmp.eq.s32.totalorder %s15, 0
    %p113 = por %p111, %p112
    %s114 = ssub.s32 %s16, %s35
    %s115 = ssub.s32 %s18, %s27
    %s116 = sor.u32 %s114, %s115
    %s117 = ssub.s32 %s17, %s31
    %s118 = sor.u32 %s116, %s117
    %p119 = scmp.eq.s32.totalorder %s118, 0
    %s121 = sadd.s32 %s120, 1
    %s122 = scalar_select %p119, %s120, %s121
    %p125 = pneg %p119
    %p126 = scmp.eq.s32.totalorder %s9, 3
    %p127 = por %p125, %p126
    %p128 = scmp.ne.s32.totalorder %s120, %s123
    %p129 = scmp.eq.s32.totalorder %s9, 0
    %p130 = por %p128, %p129
    %p131 = scmp.ne.s32.totalorder %s120, %s123
    %p132 = scmp.eq.s32.totalorder %s14, 3
    %p133 = por %p131, %p132
    %p134 = scmp.ne.s32.totalorder %s123, %s124
    %p135 = scmp.eq.s32.totalorder %s14, 0
    %p136 = por %p134, %p135
    %p137 = scmp.ne.s32.totalorder %s123, %s124
    %p138 = scmp.eq.s32.totalorder %s15, 3
    %p139 = por %p137, %p138
    %p141 = scmp.ne.s32.totalorder %s124, %s140
    %p142 = scmp.eq.s32.totalorder %s15, 0
    %p143 = por %p141, %p142
    %p144 = scmp.le.s32.totalorder 1, %s9
    %p145 = scmp.lt.s32.totalorder %s9, 5
    %p146 = pnand %p144, %p145
    %p147 = pneg %p146
    // Predicated region
    $region9: #{conv_bn_relu.1} parent=5 // pred_check
      _
    $region10: #{conv_bn_relu.1} parent=5 // pred_check_branch
      %149 = sbr.rel (%p146) target = $region12
    $region11: #{conv_bn_relu.1} parent=5 // pred_region
      %s150 = ssub.s32 %s9, 1
      // Predicated region
      $region13: #{conv_bn_relu.1} parent=11 // pred_check
        %p151 = pneg %p80
      $region14: #{conv_bn_relu.1} parent=11 // pred_check_branch
        %153 = sbr.rel (%p151) target = $region16
      $region15: #{conv_bn_relu.1} parent=11 // pred_region
        %p154 = scmp.lt.s32.totalorder %s20, 0
        %s155 = scalar_select %p154, %s20, 0
        %s156 = smul.addr %s155, 4
        %s157 = scalar_lea.vmem %s1, %s156
      $region16: #{conv_bn_relu.1} parent=11 // pred_fallthru
        _
      // Predicated region
      $region17: #{conv_bn_relu.1} parent=11 // pred_check
        %p158 = pneg %p106
      $region18: #{conv_bn_relu.1} parent=11 // pred_check_branch
        %160 = sbr.rel (%p158) target = $region20
      $region19: #{conv_bn_relu.1} parent=11 // pred_region
        %p161 = scmp.lt.s32.totalorder %s20, 0
        %s162 = scalar_select %p161, %s20, 0
        %s163 = scalar_lea.vmem %s2, %s162
      $region20: #{conv_bn_relu.1} parent=11 // pred_fallthru
        _
    $region12: #{conv_bn_relu.1} parent=5 // pred_fallthru
      _
    %p164 = scmp.lt.s32.totalorder %s9, 4
    // Predicated region
    $region21: #{conv_bn_relu.1} parent=5 // pred_check
      %p165 = pneg %p164
    $region22: #{conv_bn_relu.1} parent=5 // pred_check_branch
      %167 = sbr.rel (%p165) target = $region24
    $region23: #{conv_bn_relu.1} parent=5 // pred_region
      // Predicated region
      $region25: #{conv_bn_relu.1} parent=23 // pred_check
        %p168 = pneg %p48
      $region26: #{conv_bn_relu.1} parent=23 // pred_check_branch
        %170 = sbr.rel (%p168) target = $region28
      $region27: #{conv_bn_relu.1} parent=23 // pred_region
        %p171 = scmp.lt.s32.totalorder %s16, 1
        %s172 = scalar_select %p171, %s16, 1
        %s173 = smul.addr %s172, 72
        %s174 = smul.addr %s173, 4
        %s175 = scalar_lea.vmem %s0, %s174
      $region28: #{conv_bn_relu.1} parent=23 // pred_fallthru
        _
    $region24: #{conv_bn_relu.1} parent=5 // pred_fallthru
      _
    %p176 = scmp.le.s32.totalorder 1, %s9
    %p177 = scmp.lt.s32.totalorder %s9, 5
    %p178 = pnand %p176, %p177
    %p179 = pneg %p178
    // Predicated region
    $region29: #{conv_bn_relu.1} parent=5 // pred_check
      _
    $region30: #{conv_bn_relu.1} parent=5 // pred_check_branch
      %181 = sbr.rel (%p178) target = $region32
    $region31: #{conv_bn_relu.1} parent=5 // pred_region
      %s182 = ssub.s32 %s9, 1
      %p183 = scmp.lt.s32.totalorder %s19, 1
      %s184 = scalar_select %p183, %s19, 1
      %s185 = smul.addr %s184, 72
      %s186 = smul.addr %s185, 4
      %s187 = scalar_lea.vmem %s0, %s186
      %p188 = pneg %p54
      %p189 = pneg %p51
      %p190 = scmp.lt.s32.totalorder %s20, 0
      %s191 = scalar_select %p190, %s20, 0
      %s192 = smul.addr %s191, 4
      %s193 = scalar_lea.vmem %s1, %s192
      %p194 = pneg %p80
      %p195 = pneg %p77
      %p196 = scmp.lt.s32.totalorder %s20, 0
      %s197 = scalar_select %p196, %s20, 0
      %s198 = scalar_lea.vmem %s2, %s197
      %p199 = pneg %p106
      %p200 = pneg %p103
      %p201 = pneg %p136
      %p202 = pneg %p133
      %s203 = smul.u32 32, %s21
      %p204 = scmp.lt.s32.totalorder %s19, 1
      %s205 = scalar_select %p204, %s19, 1
      %p206 = scmp.lt.s32.totalorder %s203, 63
      %s207 = scalar_select %p206, %s203, 63
      %p208 = scmp.lt.s32.totalorder %s20, 0
      %s209 = scalar_select %p208, %s20, 0
      %s210 = sadd.s32 %s209, %s207
      %s211 = smul.addr %s205, 64
      %s212 = sadd.s32 %s210, %s211
      %s213 = smul.addr %s212, 4
      %s214 = scalar_lea.vmem %s3, %s213
      %p215 = scmp.lt.s32.totalorder %s19, 1
      %s216 = scalar_select %p215, %s19, 1
      %s217 = smul.addr %s216, 72
      %s218 = smul.addr %s217, 4
      %s219 = scalar_lea.vmem %s0, %s218
      %p220 = scmp.lt.s32.totalorder %s20, 0
      %s221 = scalar_select %p220, %s20, 0
      %s222 = smul.addr %s221, 4
      %s223 = scalar_lea.vmem %s1, %s222
      %p224 = scmp.lt.s32.totalorder %s20, 0
      %s225 = scalar_select %p224, %s20, 0
      %s226 = scalar_lea.vmem %s2, %s225
      %s227 = smul.u32 32, %s21
      %p228 = scmp.lt.s32.totalorder %s19, 1
      %s229 = scalar_select %p228, %s19, 1
      %p230 = scmp.lt.s32.totalorder %s227, 63
      %s231 = scalar_select %p230, %s227, 63
      %p232 = scmp.lt.s32.totalorder %s20, 0
      %s233 = scalar_select %p232, %s20, 0
      %s234 = sadd.s32 %s233, %s231
      %s235 = smul.addr %s229, 64
      %s236 = sadd.s32 %s234, %s235
      %s237 = smul.addr %s236, 4
      %s238 = scalar_lea.vmem %s3, %s237
      %s239 = smul.u32 32, %s21
      %s241 = smul.u32 %s21, 256
      %s242 = sshra.s32 %s241, 3
      %s243 = sand.u32 %s241, 7
      %s244 = smul.addr %s242, 4
      %s245 = scalar_lea.vmem %s219, %s244
      %v246 = vld [vmem:[%s245] sm:$0xf]
      %v247 = vld [vmem:[%s245 + $0x4] sm:$0xf]
      %v248 = vld [vmem:[%s245 + $0x8] sm:$0xf]
      %v249 = vld [vmem:[%s245 + $0xc] sm:$0xf]
      %v250 = vld [vmem:[%s245 + $0x10] sm:$0xf]
      %v251 = vld [vmem:[%s245 + $0x14] sm:$0xf]
      %v252 = vld [vmem:[%s245 + $0x18] sm:$0xf]
      %v253 = vld [vmem:[%s245 + $0x1c] sm:$0xf]
      %v254 = vld [vmem:[%s245 + $0x20] sm:$0xf]
      %v255 = vld [vmem:[%s245 + $0x24] sm:$0xf]
      %v256 = vld [vmem:[%s245 + $0x28] sm:$0xf]
      %v257 = vld [vmem:[%s245 + $0x2c] sm:$0xf]
      %v258 = vld [vmem:[%s245 + $0x30] sm:$0xf]
      %v259 = vld [vmem:[%s245 + $0x34] sm:$0xf]
      %v260 = vld [vmem:[%s245 + $0x38] sm:$0xf]
      %v261 = vld [vmem:[%s245 + $0x3c] sm:$0xf]
      %v262 = vld [vmem:[%s245 + $0x40] sm:$0xf]
      %v263 = vld [vmem:[%s245 + $0x44] sm:$0xf]
      %v264 = vld [vmem:[%s245 + $0x48] sm:$0xf]
      %v265 = vld [vmem:[%s245 + $0x4c] sm:$0xf]
      %v266 = vld [vmem:[%s245 + $0x50] sm:$0xf]
      %v267 = vld [vmem:[%s245 + $0x54] sm:$0xf]
      %v268 = vld [vmem:[%s245 + $0x58] sm:$0xf]
      %v269 = vld [vmem:[%s245 + $0x5c] sm:$0xf]
      %v270 = vld [vmem:[%s245 + $0x60] sm:$0xf]
      %v271 = vld [vmem:[%s245 + $0x64] sm:$0xf]
      %v272 = vld [vmem:[%s245 + $0x68] sm:$0xf]
      %v273 = vld [vmem:[%s245 + $0x6c] sm:$0xf]
      %v274 = vld [vmem:[%s245 + $0x70] sm:$0xf]
      %v275 = vld [vmem:[%s245 + $0x74] sm:$0xf]
      %v276 = vld [vmem:[%s245 + $0x78] sm:$0xf]
      %v277 = vld [vmem:[%s245 + $0x7c] sm:$0xf]
      %v278 = vld [vmem:[%s223] sm:$0xf]
      %v279 = vld [vmem:[%s223 + $0x4] sm:$0x3]
      %s280 = sadd.s32 %s241, 32
      %s281 = sshra.s32 %s280, 3
      %s282 = sand.u32 %s280, 7
      %s283 = smul.addr %s281, 4
      %s284 = scalar_lea.vmem %s219, %s283
      %v285 = vld [vmem:[%s284] sm:$0xf]
      %v286 = vld [vmem:[%s284 + $0x4] sm:$0xf]
      %v287 = vld [vmem:[%s284 + $0x8] sm:$0xf]
      %v288 = vld [vmem:[%s284 + $0xc] sm:$0xf]
      %v289 = vld [vmem:[%s284 + $0x10] sm:$0xf]
      %v290 = vld [vmem:[%s284 + $0x14] sm:$0xf]
      %v291 = vld [vmem:[%s284 + $0x18] sm:$0xf]
      %v292 = vld [vmem:[%s284 + $0x1c] sm:$0xf]
      %v293 = vld [vmem:[%s284 + $0x20] sm:$0xf]
      %v294 = vld [vmem:[%s284 + $0x24] sm:$0xf]
      %v295 = vld [vmem:[%s284 + $0x28] sm:$0xf]
      %v296 = vld [vmem:[%s284 + $0x2c] sm:$0xf]
      %v297 = vld [vmem:[%s284 + $0x30] sm:$0xf]
      %v298 = vld [vmem:[%s284 + $0x34] sm:$0xf]
      %v299 = vld [vmem:[%s284 + $0x38] sm:$0xf]
      %v300 = vld [vmem:[%s284 + $0x3c] sm:$0xf]
      %v301 = vld [vmem:[%s284 + $0x40] sm:$0xf]
      %v302 = vld [vmem:[%s284 + $0x44] sm:$0xf]
      %v303 = vld [vmem:[%s284 + $0x48] sm:$0xf]
      %v304 = vld [vmem:[%s284 + $0x4c] sm:$0xf]
      %v305 = vld [vmem:[%s284 + $0x50] sm:$0xf]
      %v306 = vld [vmem:[%s284 + $0x54] sm:$0xf]
      %v307 = vld [vmem:[%s284 + $0x58] sm:$0xf]
      %v308 = vld [vmem:[%s284 + $0x5c] sm:$0xf]
      %v309 = vld [vmem:[%s284 + $0x60] sm:$0xf]
      %v310 = vld [vmem:[%s284 + $0x64] sm:$0xf]
      %v311 = vld [vmem:[%s284 + $0x68] sm:$0xf]
      %v312 = vld [vmem:[%s284 + $0x6c] sm:$0xf]
      %v313 = vld [vmem:[%s284 + $0x70] sm:$0xf]
      %v314 = vld [vmem:[%s284 + $0x74] sm:$0xf]
      %v315 = vld [vmem:[%s284 + $0x78] sm:$0xf]
      %v316 = vld [vmem:[%s284 + $0x7c] sm:$0xf]
      %s317 = scalar_lea.vmem %s223, 8
      %v318 = vld [vmem:[%s317] sm:$0xf]
      %v319 = vld [vmem:[%s317 + $0x4] sm:$0x3]
      %v352 = vunpack.c.l.b16 %v285
      %v353 = vunpack.c.l.b16 %v286
      %v354 = vunpack.c.l.b16 %v287
      %v355 = vunpack.c.l.b16 %v288
      %v356 = vunpack.c.l.b16 %v289
      %v357 = vunpack.c.l.b16 %v290
      %v358 = vunpack.c.l.b16 %v291
      %v359 = vunpack.c.l.b16 %v292
      %v360 = vunpack.c.l.b16 %v293
      %v361 = vunpack.c.l.b16 %v294
      %v362 = vunpack.c.l.b16 %v295
      %v363 = vunpack.c.l.b16 %v296
      %v364 = vunpack.c.l.b16 %v297
      %v365 = vunpack.c.l.b16 %v298
      %v366 = vunpack.c.l.b16 %v299
      %v367 = vunpack.c.l.b16 %v300
      %v368 = vunpack.c.l.b16 %v301
      %v369 = vunpack.c.l.b16 %v302
      %v370 = vunpack.c.l.b16 %v303
      %v371 = vunpack.c.l.b16 %v304
      %v372 = vunpack.c.l.b16 %v305
      %v373 = vunpack.c.l.b16 %v306
      %v374 = vunpack.c.l.b16 %v307
      %v375 = vunpack.c.l.b16 %v308
      %v376 = vunpack.c.l.b16 %v309
      %v377 = vunpack.c.l.b16 %v310
      %v378 = vunpack.c.l.b16 %v311
      %v379 = vunpack.c.l.b16 %v312
      %v380 = vunpack.c.l.b16 %v313
      %v381 = vunpack.c.l.b16 %v314
      %v382 = vunpack.c.l.b16 %v315
      %v383 = vunpack.c.l.b16 %v316
      %v384 = vpack.c.b16 %v353, %v352
      %v385 = vpack.c.b16 %v355, %v354
      %v386 = vpack.c.b16 %v357, %v356
      %v387 = vpack.c.b16 %v359, %v358
      %v388 = vpack.c.b16 %v361, %v360
      %v389 = vpack.c.b16 %v363, %v362
      %v390 = vpack.c.b16 %v365, %v364
      %v391 = vpack.c.b16 %v367, %v366
      %v392 = vpack.c.b16 %v369, %v368
      %v393 = vpack.c.b16 %v371, %v370
      %v394 = vpack.c.b16 %v373, %v372
      %v395 = vpack.c.b16 %v375, %v374
      %v396 = vpack.c.b16 %v377, %v376
      %v397 = vpack.c.b16 %v379, %v378
      %v398 = vpack.c.b16 %v381, %v380
      %v399 = vpack.c.b16 %v383, %v382
      %v402 = vunpack.c.l.b16 %v318
      %v403 = vunpack.c.l.b16 %v319
      %v404 = vpack.c.b16 %v403, %v402
      %vm405 = vcmask 97280
      %v407 = vsel %vm405, %v384, 0
      %v410 = vsel %vm405, %v385, 0
      %v413 = vsel %vm405, %v386, 0
      %v416 = vsel %vm405, %v387, 0
      %v419 = vsel %vm405, %v388, 0
      %v422 = vsel %vm405, %v389, 0
      %v425 = vsel %vm405, %v390, 0
      %v428 = vsel %vm405, %v391, 0
      %v431 = vsel %vm405, %v392, 0
      %v434 = vsel %vm405, %v393, 0
      %v437 = vsel %vm405, %v394, 0
      %v440 = vsel %vm405, %v395, 0
      %v443 = vsel %vm405, %v396, 0
      %v446 = vsel %vm405, %v397, 0
      %v449 = vsel %vm405, %v398, 0
      %v452 = vsel %vm405, %v399, 0
      %vm454 = vcmask 1045504
      %v456 = vsel %vm454, %v404, 0
      %458 = vmatpush.bf16.msra.mxu0 0
      %459 = vmatpush.bf16.msra.mxu0 0
      %460 = vmatpush.bf16.msra.mxu0 0
      %461 = vmatpush.bf16.msra.mxu0 0
      %462 = vmatpush.bf16.msra.mxu0 0
      %463 = vmatpush.bf16.msra.mxu0 0
      %464 = vmatpush.bf16.msra.mxu0 0
      %465 = vmatpush.bf16.msra.mxu0 %v456
      %466 = vmatmul.bf16.gmra.mxu0 %v407
      %v467 = vpop.f32.mrf.mxu0
      %v468 = vadd.f32 0.0, %v467
      %v469 = vpop.f32.mrf.mxu0
      %v470 = vadd.f32 0.0, %v469
      %471 = vmatmul.bf16.gmra.mxu0 %v410
      %v472 = vpop.f32.mrf.mxu0
      %v473 = vadd.f32 0.0, %v472
      %v474 = vpop.f32.mrf.mxu0
      %v475 = vadd.f32 0.0, %v474
      %476 = vmatmul.bf16.gmra.mxu0 %v413
      %v477 = vpop.f32.mrf.mxu0
      %v478 = vadd.f32 0.0, %v477
      %v479 = vpop.f32.mrf.mxu0
      %v480 = vadd.f32 0.0, %v479
      %481 = vmatmul.bf16.gmra.mxu0 %v416
      %v482 = vpop.f32.mrf.mxu0
      %v483 = vadd.f32 0.0, %v482
      %v484 = vpop.f32.mrf.mxu0
      %v485 = vadd.f32 0.0, %v484
      %486 = vmatmul.bf16.gmra.mxu0 %v419
      %v487 = vpop.f32.mrf.mxu0
      %v488 = vadd.f32 0.0, %v487
      %v489 = vpop.f32.mrf.mxu0
      %v490 = vadd.f32 0.0, %v489
      %491 = vmatmul.bf16.gmra.mxu0 %v422
      %v492 = vpop.f32.mrf.mxu0
      %v493 = vadd.f32 0.0, %v492
      %v494 = vpop.f32.mrf.mxu0
      %v495 = vadd.f32 0.0, %v494
      %496 = vmatmul.bf16.gmra.mxu0 %v425
      %v497 = vpop.f32.mrf.mxu0
      %v498 = vadd.f32 0.0, %v497
      %v499 = vpop.f32.mrf.mxu0
      %v500 = vadd.f32 0.0, %v499
      %501 = vmatmul.bf16.gmra.mxu0 %v428
      %v502 = vpop.f32.mrf.mxu0
      %v503 = vadd.f32 0.0, %v502
      %v504 = vpop.f32.mrf.mxu0
      %v505 = vadd.f32 0.0, %v504
      %506 = vmatmul.bf16.gmra.mxu0 %v431
      %v507 = vpop.f32.mrf.mxu0
      %v508 = vadd.f32 0.0, %v507
      %v509 = vpop.f32.mrf.mxu0
      %v510 = vadd.f32 0.0, %v509
      %511 = vmatmul.bf16.gmra.mxu0 %v434
      %v512 = vpop.f32.mrf.mxu0
      %v513 = vadd.f32 0.0, %v512
      %v514 = vpop.f32.mrf.mxu0
      %v515 = vadd.f32 0.0, %v514
      %516 = vmatmul.bf16.gmra.mxu0 %v437
      %v517 = vpop.f32.mrf.mxu0
      %v518 = vadd.f32 0.0, %v517
      %v519 = vpop.f32.mrf.mxu0
      %v520 = vadd.f32 0.0, %v519
      %521 = vmatmul.bf16.gmra.mxu0 %v440
      %v522 = vpop.f32.mrf.mxu0
      %v523 = vadd.f32 0.0, %v522
      %v524 = vpop.f32.mrf.mxu0
      %v525 = vadd.f32 0.0, %v524
      %526 = vmatmul.bf16.gmra.mxu0 %v443
      %v527 = vpop.f32.mrf.mxu0
      %v528 = vadd.f32 0.0, %v527
      %v529 = vpop.f32.mrf.mxu0
      %v530 = vadd.f32 0.0, %v529
      %531 = vmatmul.bf16.gmra.mxu0 %v446
      %v532 = vpop.f32.mrf.mxu0
      %v533 = vadd.f32 0.0, %v532
      %v534 = vpop.f32.mrf.mxu0
      %v535 = vadd.f32 0.0, %v534
      %536 = vmatmul.bf16.gmra.mxu0 %v449
      %v537 = vpop.f32.mrf.mxu0
      %v538 = vadd.f32 0.0, %v537
      %v539 = vpop.f32.mrf.mxu0
      %v540 = vadd.f32 0.0, %v539
      %541 = vmatmul.bf16.gmra.mxu0 %v452
      %v542 = vpop.f32.mrf.mxu0
      %v543 = vadd.f32 0.0, %v542
      %v544 = vpop.f32.mrf.mxu0
      %v545 = vadd.f32 0.0, %v544
      %546 = vdwg.mxu0
      %v579 = vunpack.c.l.b16 %v246
      %v580 = vunpack.c.l.b16 %v247
      %v581 = vunpack.c.l.b16 %v248
      %v582 = vunpack.c.l.b16 %v249
      %v583 = vunpack.c.l.b16 %v250
      %v584 = vunpack.c.l.b16 %v251
      %v585 = vunpack.c.l.b16 %v252
      %v586 = vunpack.c.l.b16 %v253
      %v587 = vunpack.c.l.b16 %v254
      %v588 = vunpack.c.l.b16 %v255
      %v589 = vunpack.c.l.b16 %v256
      %v590 = vunpack.c.l.b16 %v257
      %v591 = vunpack.c.l.b16 %v258
      %v592 = vunpack.c.l.b16 %v259
      %v593 = vunpack.c.l.b16 %v260
      %v594 = vunpack.c.l.b16 %v261
      %v595 = vunpack.c.l.b16 %v262
      %v596 = vunpack.c.l.b16 %v263
      %v597 = vunpack.c.l.b16 %v264
      %v598 = vunpack.c.l.b16 %v265
      %v599 = vunpack.c.l.b16 %v266
      %v600 = vunpack.c.l.b16 %v267
      %v601 = vunpack.c.l.b16 %v268
      %v602 = vunpack.c.l.b16 %v269
      %v603 = vunpack.c.l.b16 %v270
      %v604 = vunpack.c.l.b16 %v271
      %v605 = vunpack.c.l.b16 %v272
      %v606 = vunpack.c.l.b16 %v273
      %v607 = vunpack.c.l.b16 %v274
      %v608 = vunpack.c.l.b16 %v275
      %v609 = vunpack.c.l.b16 %v276
      %v610 = vunpack.c.l.b16 %v277
      %v611 = vpack.c.b16 %v580, %v579
      %v612 = vpack.c.b16 %v582, %v581
      %v613 = vpack.c.b16 %v584, %v583
      %v614 = vpack.c.b16 %v586, %v585
      %v615 = vpack.c.b16 %v588, %v587
      %v616 = vpack.c.b16 %v590, %v589
      %v617 = vpack.c.b16 %v592, %v591
      %v618 = vpack.c.b16 %v594, %v593
      %v619 = vpack.c.b16 %v596, %v595
      %v620 = vpack.c.b16 %v598, %v597
      %v621 = vpack.c.b16 %v600, %v599
      %v622 = vpack.c.b16 %v602, %v601
      %v623 = vpack.c.b16 %v604, %v603
      %v624 = vpack.c.b16 %v606, %v605
      %v625 = vpack.c.b16 %v608, %v607
      %v626 = vpack.c.b16 %v610, %v609
      %v629 = vunpack.c.l.b16 %v278
      %v630 = vunpack.c.l.b16 %v279
      %v631 = vpack.c.b16 %v630, %v629
      %v633 = vsel %vm405, %v611, 0
      %v636 = vsel %vm405, %v612, 0
      %v639 = vsel %vm405, %v613, 0
      %v642 = vsel %vm405, %v614, 0
      %v645 = vsel %vm405, %v615, 0
      %v648 = vsel %vm405, %v616, 0
      %v651 = vsel %vm405, %v617, 0
      %v654 = vsel %vm405, %v618, 0
      %v657 = vsel %vm405, %v619, 0
      %v660 = vsel %vm405, %v620, 0
      %v663 = vsel %vm405, %v621, 0
      %v666 = vsel %vm405, %v622, 0
      %v669 = vsel %vm405, %v623, 0
      %v672 = vsel %vm405, %v624, 0
      %v675 = vsel %vm405, %v625, 0
      %v678 = vsel %vm405, %v626, 0
      %v681 = vsel %vm454, %v631, 0
      %683 = vmatpush.bf16.msra.mxu0 0
      %684 = vmatpush.bf16.msra.mxu0 0
      %685 = vmatpush.bf16.msra.mxu0 0
      %686 = vmatpush.bf16.msra.mxu0 0
      %687 = vmatpush.bf16.msra.mxu0 0
      %688 = vmatpush.bf16.msra.mxu0 0
      %689 = vmatpush.bf16.msra.mxu0 0
      %690 = vmatpush.bf16.msra.mxu0 %v681
      %691 = vmatmul.bf16.gmra.mxu0 %v633
      %v692 = vpop.f32.mrf.mxu0
      %v693 = vadd.f32 %v468, %v692
      %v694 = vpop.f32.mrf.mxu0
      %v695 = vadd.f32 %v470, %v694
      %696 = vmatmul.bf16.gmra.mxu0 %v636
      %v697 = vpop.f32.mrf.mxu0
      %v698 = vadd.f32 %v473, %v697
      %v699 = vpop.f32.mrf.mxu0
      %v700 = vadd.f32 %v475, %v699
      %701 = vmatmul.bf16.gmra.mxu0 %v639
      %v702 = vpop.f32.mrf.mxu0
      %v703 = vadd.f32 %v478, %v702
      %v704 = vpop.f32.mrf.mxu0
      %v705 = vadd.f32 %v480, %v704
      %706 = vmatmul.bf16.gmra.mxu0 %v642
      %v707 = vpop.f32.mrf.mxu0
      %v708 = vadd.f32 %v483, %v707
      %v709 = vpop.f32.mrf.mxu0
      %v710 = vadd.f32 %v485, %v709
      %711 = vmatmul.bf16.gmra.mxu0 %v645
      %v712 = vpop.f32.mrf.mxu0
      %v713 = vadd.f32 %v488, %v712
      %v714 = vpop.f32.mrf.mxu0
      %v715 = vadd.f32 %v490, %v714
      %716 = vmatmul.bf16.gmra.mxu0 %v648
      %v717 = vpop.f32.mrf.mxu0
      %v718 = vadd.f32 %v493, %v717
      %v719 = vpop.f32.mrf.mxu0
      %v720 = vadd.f32 %v495, %v719
      %721 = vmatmul.bf16.gmra.mxu0 %v651
      %v722 = vpop.f32.mrf.mxu0
      %v723 = vadd.f32 %v498, %v722
      %v724 = vpop.f32.mrf.mxu0
      %v725 = vadd.f32 %v500, %v724
      %726 = vmatmul.bf16.gmra.mxu0 %v654
      %v727 = vpop.f32.mrf.mxu0
      %v728 = vadd.f32 %v503, %v727
      %v729 = vpop.f32.mrf.mxu0
      %v730 = vadd.f32 %v505, %v729
      %731 = vmatmul.bf16.gmra.mxu0 %v657
      %v732 = vpop.f32.mrf.mxu0
      %v733 = vadd.f32 %v508, %v732
      %v734 = vpop.f32.mrf.mxu0
      %v735 = vadd.f32 %v510, %v734
      %736 = vmatmul.bf16.gmra.mxu0 %v660
      %v737 = vpop.f32.mrf.mxu0
      %v738 = vadd.f32 %v513, %v737
      %v739 = vpop.f32.mrf.mxu0
      %v740 = vadd.f32 %v515, %v739
      %741 = vmatmul.bf16.gmra.mxu0 %v663
      %v742 = vpop.f32.mrf.mxu0
      %v743 = vadd.f32 %v518, %v742
      %v744 = vpop.f32.mrf.mxu0
      %v745 = vadd.f32 %v520, %v744
      %746 = vmatmul.bf16.gmra.mxu0 %v666
      %v747 = vpop.f32.mrf.mxu0
      %v748 = vadd.f32 %v523, %v747
      %v749 = vpop.f32.mrf.mxu0
      %v750 = vadd.f32 %v525, %v749
      %751 = vmatmul.bf16.gmra.mxu0 %v669
      %v752 = vpop.f32.mrf.mxu0
      %v753 = vadd.f32 %v528, %v752
      %v754 = vpop.f32.mrf.mxu0
      %v755 = vadd.f32 %v530, %v754
      %756 = vmatmul.bf16.gmra.mxu0 %v672
      %v757 = vpop.f32.mrf.mxu0
      %v758 = vadd.f32 %v533, %v757
      %v759 = vpop.f32.mrf.mxu0
      %v760 = vadd.f32 %v535, %v759
      %761 = vmatmul.bf16.gmra.mxu0 %v675
      %v762 = vpop.f32.mrf.mxu0
      %v763 = vadd.f32 %v538, %v762
      %v764 = vpop.f32.mrf.mxu0
      %v765 = vadd.f32 %v540, %v764
      %766 = vmatmul.bf16.gmra.mxu0 %v678
      %v767 = vpop.f32.mrf.mxu0
      %v768 = vadd.f32 %v543, %v767
      %v769 = vpop.f32.mrf.mxu0
      %v770 = vadd.f32 %v545, %v769
      %771 = vdwg.mxu0
      %s772 = sadd.s32 %s241, 64
      %s773 = sshra.s32 %s772, 3
      %s774 = sand.u32 %s772, 7
      %s775 = smul.addr %s773, 4
      %s776 = scalar_lea.vmem %s219, %s775
      %v777 = vld [vmem:[%s776] sm:$0xf]
      %v778 = vld [vmem:[%s776 + $0x4] sm:$0xf]
      %v779 = vld [vmem:[%s776 + $0x8] sm:$0xf]
      %v780 = vld [vmem:[%s776 + $0xc] sm:$0xf]
      %v781 = vld [vmem:[%s776 + $0x10] sm:$0xf]
      %v782 = vld [vmem:[%s776 + $0x14] sm:$0xf]
      %v783 = vld [vmem:[%s776 + $0x18] sm:$0xf]
      %v784 = vld [vmem:[%s776 + $0x1c] sm:$0xf]
      %v785 = vld [vmem:[%s776 + $0x20] sm:$0xf]
      %v786 = vld [vmem:[%s776 + $0x24] sm:$0xf]
      %v787 = vld [vmem:[%s776 + $0x28] sm:$0xf]
      %v788 = vld [vmem:[%s776 + $0x2c] sm:$0xf]
      %v789 = vld [vmem:[%s776 + $0x30] sm:$0xf]
      %v790 = vld [vmem:[%s776 + $0x34] sm:$0xf]
      %v791 = vld [vmem:[%s776 + $0x38] sm:$0xf]
      %v792 = vld [vmem:[%s776 + $0x3c] sm:$0xf]
      %v793 = vld [vmem:[%s776 + $0x40] sm:$0xf]
      %v794 = vld [vmem:[%s776 + $0x44] sm:$0xf]
      %v795 = vld [vmem:[%s776 + $0x48] sm:$0xf]
      %v796 = vld [vmem:[%s776 + $0x4c] sm:$0xf]
      %v797 = vld [vmem:[%s776 + $0x50] sm:$0xf]
      %v798 = vld [vmem:[%s776 + $0x54] sm:$0xf]
      %v799 = vld [vmem:[%s776 + $0x58] sm:$0xf]
      %v800 = vld [vmem:[%s776 + $0x5c] sm:$0xf]
      %v801 = vld [vmem:[%s776 + $0x60] sm:$0xf]
      %v802 = vld [vmem:[%s776 + $0x64] sm:$0xf]
      %v803 = vld [vmem:[%s776 + $0x68] sm:$0xf]
      %v804 = vld [vmem:[%s776 + $0x6c] sm:$0xf]
      %v805 = vld [vmem:[%s776 + $0x70] sm:$0xf]
      %v806 = vld [vmem:[%s776 + $0x74] sm:$0xf]
      %v807 = vld [vmem:[%s776 + $0x78] sm:$0xf]
      %v808 = vld [vmem:[%s776 + $0x7c] sm:$0xf]
      %s809 = scalar_lea.vmem %s223, 16
      %v810 = vld [vmem:[%s809] sm:$0xf]
      %v811 = vld [vmem:[%s809 + $0x4] sm:$0x3]
      %v844 = vunpack.c.l.b16 %v777
      %v845 = vunpack.c.l.b16 %v778
      %v846 = vunpack.c.l.b16 %v779
      %v847 = vunpack.c.l.b16 %v780
      %v848 = vunpack.c.l.b16 %v781
      %v849 = vunpack.c.l.b16 %v782
      %v850 = vunpack.c.l.b16 %v783
      %v851 = vunpack.c.l.b16 %v784
      %v852 = vunpack.c.l.b16 %v785
      %v853 = vunpack.c.l.b16 %v786
      %v854 = vunpack.c.l.b16 %v787
      %v855 = vunpack.c.l.b16 %v788
      %v856 = vunpack.c.l.b16 %v789
      %v857 = vunpack.c.l.b16 %v790
      %v858 = vunpack.c.l.b16 %v791
      %v859 = vunpack.c.l.b16 %v792
      %v860 = vunpack.c.l.b16 %v793
      %v861 = vunpack.c.l.b16 %v794
      %v862 = vunpack.c.l.b16 %v795
      %v863 = vunpack.c.l.b16 %v796
      %v864 = vunpack.c.l.b16 %v797
      %v865 = vunpack.c.l.b16 %v798
      %v866 = vunpack.c.l.b16 %v799
      %v867 = vunpack.c.l.b16 %v800
      %v868 = vunpack.c.l.b16 %v801
      %v869 = vunpack.c.l.b16 %v802
      %v870 = vunpack.c.l.b16 %v803
      %v871 = vunpack.c.l.b16 %v804
      %v872 = vunpack.c.l.b16 %v805
      %v873 = vunpack.c.l.b16 %v806
      %v874 = vunpack.c.l.b16 %v807
      %v875 = vunpack.c.l.b16 %v808
      %v876 = vpack.c.b16 %v845, %v844
      %v877 = vpack.c.b16 %v847, %v846
      %v878 = vpack.c.b16 %v849, %v848
      %v879 = vpack.c.b16 %v851, %v850
      %v880 = vpack.c.b16 %v853, %v852
      %v881 = vpack.c.b16 %v855, %v854
      %v882 = vpack.c.b16 %v857, %v856
      %v883 = vpack.c.b16 %v859, %v858
      %v884 = vpack.c.b16 %v861, %v860
      %v885 = vpack.c.b16 %v863, %v862
      %v886 = vpack.c.b16 %v865, %v864
      %v887 = vpack.c.b16 %v867, %v866
      %v888 = vpack.c.b16 %v869, %v868
      %v889 = vpack.c.b16 %v871, %v870
      %v890 = vpack.c.b16 %v873, %v872
      %v891 = vpack.c.b16 %v875, %v874
      %v894 = vunpack.c.l.b16 %v810
      %v895 = vunpack.c.l.b16 %v811
      %v896 = vpack.c.b16 %v895, %v894
      %v898 = vsel %vm405, %v876, 0
      %v901 = vsel %vm405, %v877, 0
      %v904 = vsel %vm405, %v878, 0
      %v907 = vsel %vm405, %v879, 0
      %v910 = vsel %vm405, %v880, 0
      %v913 = vsel %vm405, %v881, 0
      %v916 = vsel %vm405, %v882, 0
      %v919 = vsel %vm405, %v883, 0
      %v922 = vsel %vm405, %v884, 0
      %v925 = vsel %vm405, %v885, 0
      %v928 = vsel %vm405, %v886, 0
      %v931 = vsel %vm405, %v887, 0
      %v934 = vsel %vm405, %v888, 0
      %v937 = vsel %vm405, %v889, 0
      %v940 = vsel %vm405, %v890, 0
      %v943 = vsel %vm405, %v891, 0
      %v946 = vsel %vm454, %v896, 0
      %948 = vmatpush.bf16.msra.mxu0 0
      %949 = vmatpush.bf16.msra.mxu0 0
      %950 = vmatpush.bf16.msra.mxu0 0
      %951 = vmatpush.bf16.msra.mxu0 0
      %952 = vmatpush.bf16.msra.mxu0 0
      %953 = vmatpush.bf16.msra.mxu0 0
      %954 = vmatpush.bf16.msra.mxu0 0
      %955 = vmatpush.bf16.msra.mxu0 %v946
      %956 = vmatmul.bf16.gmra.mxu0 %v898
      %v957 = vpop.f32.mrf.mxu0
      %v958 = vadd.f32 0.0, %v957
      %v959 = vpop.f32.mrf.mxu0
      %v960 = vadd.f32 0.0, %v959
      %961 = vmatmul.bf16.gmra.mxu0 %v901
      %v962 = vpop.f32.mrf.mxu0
      %v963 = vadd.f32 0.0, %v962
      %v964 = vpop.f32.mrf.mxu0
      %v965 = vadd.f32 0.0, %v964
      %966 = vmatmul.bf16.gmra.mxu0 %v904
      %v967 = vpop.f32.mrf.mxu0
      %v968 = vadd.f32 0.0, %v967
      %v969 = vpop.f32.mrf.mxu0
      %v970 = vadd.f32 0.0, %v969
      %971 = vmatmul.bf16.gmra.mxu0 %v907
      %v972 = vpop.f32.mrf.mxu0
      %v973 = vadd.f32 0.0, %v972
      %v974 = vpop.f32.mrf.mxu0
      %v975 = vadd.f32 0.0, %v974
      %976 = vmatmul.bf16.gmra.mxu0 %v910
      %v977 = vpop.f32.mrf.mxu0
      %v978 = vadd.f32 0.0, %v977
      %v979 = vpop.f32.mrf.mxu0
      %v980 = vadd.f32 0.0, %v979
      %981 = vmatmul.bf16.gmra.mxu0 %v913
      %v982 = vpop.f32.mrf.mxu0
      %v983 = vadd.f32 0.0, %v982
      %v984 = vpop.f32.mrf.mxu0
      %v985 = vadd.f32 0.0, %v984
      %986 = vmatmul.bf16.gmra.mxu0 %v916
      %v987 = vpop.f32.mrf.mxu0
      %v988 = vadd.f32 0.0, %v987
      %v989 = vpop.f32.mrf.mxu0
      %v990 = vadd.f32 0.0, %v989
      %991 = vmatmul.bf16.gmra.mxu0 %v919
      %v992 = vpop.f32.mrf.mxu0
      %v993 = vadd.f32 0.0, %v992
      %v994 = vpop.f32.mrf.mxu0
      %v995 = vadd.f32 0.0, %v994
      %996 = vmatmul.bf16.gmra.mxu0 %v922
      %v997 = vpop.f32.mrf.mxu0
      %v998 = vadd.f32 0.0, %v997
      %v999 = vpop.f32.mrf.mxu0
      %v1000 = vadd.f32 0.0, %v999
      %1001 = vmatmul.bf16.gmra.mxu0 %v925
      %v1002 = vpop.f32.mrf.mxu0
      %v1003 = vadd.f32 0.0, %v1002
      %v1004 = vpop.f32.mrf.mxu0
      %v1005 = vadd.f32 0.0, %v1004
      %1006 = vmatmul.bf16.gmra.mxu0 %v928
      %v1007 = vpop.f32.mrf.mxu0
      %v1008 = vadd.f32 0.0, %v1007
      %v1009 = vpop.f32.mrf.mxu0
      %v1010 = vadd.f32 0.0, %v1009
      %1011 = vmatmul.bf16.gmra.mxu0 %v931
      %v1012 = vpop.f32.mrf.mxu0
      %v1013 = vadd.f32 0.0, %v1012
      %v1014 = vpop.f32.mrf.mxu0
      %v1015 = vadd.f32 0.0, %v1014
      %1016 = vmatmul.bf16.gmra.mxu0 %v934
      %v1017 = vpop.f32.mrf.mxu0
      %v1018 = vadd.f32 0.0, %v1017
      %v1019 = vpop.f32.mrf.mxu0
      %v1020 = vadd.f32 0.0, %v1019
      %1021 = vmatmul.bf16.gmra.mxu0 %v937
      %v1022 = vpop.f32.mrf.mxu0
      %v1023 = vadd.f32 0.0, %v1022
      %v1024 = vpop.f32.mrf.mxu0
      %v1025 = vadd.f32 0.0, %v1024
      %1026 = vmatmul.bf16.gmra.mxu0 %v940
      %v1027 = vpop.f32.mrf.mxu0
      %v1028 = vadd.f32 0.0, %v1027
      %v1029 = vpop.f32.mrf.mxu0
      %v1030 = vadd.f32 0.0, %v1029
      %1031 = vmatmul.bf16.gmra.mxu0 %v943
      %v1032 = vpop.f32.mrf.mxu0
      %v1033 = vadd.f32 0.0, %v1032
      %v1034 = vpop.f32.mrf.mxu0
      %v1035 = vadd.f32 0.0, %v1034
      %1036 = vdwg.mxu0
      %v1037 = vadd.f32 %v693, %v958
      %v1038 = vadd.f32 %v695, %v960
      %v1039 = vadd.f32 %v698, %v963
      %v1040 = vadd.f32 %v700, %v965
      %v1041 = vadd.f32 %v703, %v968
      %v1042 = vadd.f32 %v705, %v970
      %v1043 = vadd.f32 %v708, %v973
      %v1044 = vadd.f32 %v710, %v975
      %v1045 = vadd.f32 %v713, %v978
      %v1046 = vadd.f32 %v715, %v980
      %v1047 = vadd.f32 %v718, %v983
      %v1048 = vadd.f32 %v720, %v985
      %v1049 = vadd.f32 %v723, %v988
      %v1050 = vadd.f32 %v725, %v990
      %v1051 = vadd.f32 %v728, %v993
      %v1052 = vadd.f32 %v730, %v995
      %v1053 = vadd.f32 %v733, %v998
      %v1054 = vadd.f32 %v735, %v1000
      %v1055 = vadd.f32 %v738, %v1003
      %v1056 = vadd.f32 %v740, %v1005
      %v1057 = vadd.f32 %v743, %v1008
      %v1058 = vadd.f32 %v745, %v1010
      %v1059 = vadd.f32 %v748, %v1013
      %v1060 = vadd.f32 %v750, %v1015
      %v1061 = vadd.f32 %v753, %v1018
      %v1062 = vadd.f32 %v755, %v1020
      %v1063 = vadd.f32 %v758, %v1023
      %v1064 = vadd.f32 %v760, %v1025
      %v1065 = vadd.f32 %v763, %v1028
      %v1066 = vadd.f32 %v765, %v1030
      %v1067 = vadd.f32 %v768, %v1033
      %v1068 = vadd.f32 %v770, %v1035
      %v1069 = vld [vmem:[%s226] sm:$0x1]
      %v1071 = vperm.slane %v1069, 0
      %v1073 = vadd.f32 %v1037, %v1071
      %v1074 = vadd.f32 %v1038, %v1071
      %v1075 = vadd.f32 %v1039, %v1071
      %v1076 = vadd.f32 %v1040, %v1071
      %v1077 = vadd.f32 %v1041, %v1071
      %v1078 = vadd.f32 %v1042, %v1071
      %v1079 = vadd.f32 %v1043, %v1071
      %v1080 = vadd.f32 %v1044, %v1071
      %v1081 = vadd.f32 %v1045, %v1071
      %v1082 = vadd.f32 %v1046, %v1071
      %v1083 = vadd.f32 %v1047, %v1071
      %v1084 = vadd.f32 %v1048, %v1071
      %v1085 = vadd.f32 %v1049, %v1071
      %v1086 = vadd.f32 %v1050, %v1071
      %v1087 = vadd.f32 %v1051, %v1071
      %v1088 = vadd.f32 %v1052, %v1071
      %v1089 = vadd.f32 %v1053, %v1071
      %v1090 = vadd.f32 %v1054, %v1071
      %v1091 = vadd.f32 %v1055, %v1071
      %v1092 = vadd.f32 %v1056, %v1071
      %v1093 = vadd.f32 %v1057, %v1071
      %v1094 = vadd.f32 %v1058, %v1071
      %v1095 = vadd.f32 %v1059, %v1071
      %v1096 = vadd.f32 %v1060, %v1071
      %v1097 = vadd.f32 %v1061, %v1071
      %v1098 = vadd.f32 %v1062, %v1071
      %v1099 = vadd.f32 %v1063, %v1071
      %v1100 = vadd.f32 %v1064, %v1071
      %v1101 = vadd.f32 %v1065, %v1071
      %v1102 = vadd.f32 %v1066, %v1071
      %v1103 = vadd.f32 %v1067, %v1071
      %v1104 = vadd.f32 %v1068, %v1071
      %v1105 = vmax.f32 %v1073, 0.0
      %v1106 = vmax.f32 %v1074, 0.0
      %v1107 = vmax.f32 %v1075, 0.0
      %v1108 = vmax.f32 %v1076, 0.0
      %v1109 = vmax.f32 %v1077, 0.0
      %v1110 = vmax.f32 %v1078, 0.0
      %v1111 = vmax.f32 %v1079, 0.0
      %v1112 = vmax.f32 %v1080, 0.0
      %v1113 = vmax.f32 %v1081, 0.0
      %v1114 = vmax.f32 %v1082, 0.0
      %v1115 = vmax.f32 %v1083, 0.0
      %v1116 = vmax.f32 %v1084, 0.0
      %v1117 = vmax.f32 %v1085, 0.0
      %v1118 = vmax.f32 %v1086, 0.0
      %v1119 = vmax.f32 %v1087, 0.0
      %v1120 = vmax.f32 %v1088, 0.0
      %v1121 = vmax.f32 %v1089, 0.0
      %v1122 = vmax.f32 %v1090, 0.0
      %v1123 = vmax.f32 %v1091, 0.0
      %v1124 = vmax.f32 %v1092, 0.0
      %v1125 = vmax.f32 %v1093, 0.0
      %v1126 = vmax.f32 %v1094, 0.0
      %v1127 = vmax.f32 %v1095, 0.0
      %v1128 = vmax.f32 %v1096, 0.0
      %v1129 = vmax.f32 %v1097, 0.0
      %v1130 = vmax.f32 %v1098, 0.0
      %v1131 = vmax.f32 %v1099, 0.0
      %v1132 = vmax.f32 %v1100, 0.0
      %v1133 = vmax.f32 %v1101, 0.0
      %v1134 = vmax.f32 %v1102, 0.0
      %v1135 = vmax.f32 %v1103, 0.0
      %v1136 = vmax.f32 %v1104, 0.0
      %v1137 = vpack.c.bf16 %v1105, %v1105
      %v1138 = vpack.c.bf16 %v1106, %v1106
      %v1139 = vpack.c.bf16 %v1107, %v1107
      %v1140 = vpack.c.bf16 %v1108, %v1108
      %v1141 = vpack.c.bf16 %v1109, %v1109
      %v1142 = vpack.c.bf16 %v1110, %v1110
      %v1143 = vpack.c.bf16 %v1111, %v1111
      %v1144 = vpack.c.bf16 %v1112, %v1112
      %v1145 = vpack.c.bf16 %v1113, %v1113
      %v1146 = vpack.c.bf16 %v1114, %v1114
      %v1147 = vpack.c.bf16 %v1115, %v1115
      %v1148 = vpack.c.bf16 %v1116, %v1116
      %v1149 = vpack.c.bf16 %v1117, %v1117
      %v1150 = vpack.c.bf16 %v1118, %v1118
      %v1151 = vpack.c.bf16 %v1119, %v1119
      %v1152 = vpack.c.bf16 %v1120, %v1120
      %v1153 = vpack.c.bf16 %v1121, %v1121
      %v1154 = vpack.c.bf16 %v1122, %v1122
      %v1155 = vpack.c.bf16 %v1123, %v1123
      %v1156 = vpack.c.bf16 %v1124, %v1124
      %v1157 = vpack.c.bf16 %v1125, %v1125
      %v1158 = vpack.c.bf16 %v1126, %v1126
      %v1159 = vpack.c.bf16 %v1127, %v1127
      %v1160 = vpack.c.bf16 %v1128, %v1128
      %v1161 = vpack.c.bf16 %v1129, %v1129
      %v1162 = vpack.c.bf16 %v1130, %v1130
      %v1163 = vpack.c.bf16 %v1131, %v1131
      %v1164 = vpack.c.bf16 %v1132, %v1132
      %v1165 = vpack.c.bf16 %v1133, %v1133
      %v1166 = vpack.c.bf16 %v1134, %v1134
      %v1167 = vpack.c.bf16 %v1135, %v1135
      %v1168 = vpack.c.bf16 %v1136, %v1136
      %1169 = vst [vmem:[%s238] sm:$0xf] %v1137
      %1170 = vst [vmem:[%s238 + $0x4] sm:$0xf] %v1138
      %1171 = vst [vmem:[%s238 + $0x8] sm:$0xf] %v1139
      %1172 = vst [vmem:[%s238 + $0xc] sm:$0xf] %v1140
      %1173 = vst [vmem:[%s238 + $0x10] sm:$0xf] %v1141
      %1174 = vst [vmem:[%s238 + $0x14] sm:$0xf] %v1142
      %1175 = vst [vmem:[%s238 + $0x18] sm:$0xf] %v1143
      %1176 = vst [vmem:[%s238 + $0x1c] sm:$0xf] %v1144
      %1177 = vst [vmem:[%s238 + $0x20] sm:$0xf] %v1145
      %1178 = vst [vmem:[%s238 + $0x24] sm:$0xf] %v1146
      %1179 = vst [vmem:[%s238 + $0x28] sm:$0xf] %v1147
      %1180 = vst [vmem:[%s238 + $0x2c] sm:$0xf] %v1148
      %1181 = vst [vmem:[%s238 + $0x30] sm:$0xf] %v1149
      %1182 = vst [vmem:[%s238 + $0x34] sm:$0xf] %v1150
      %1183 = vst [vmem:[%s238 + $0x38] sm:$0xf] %v1151
      %1184 = vst [vmem:[%s238 + $0x3c] sm:$0xf] %v1152
      %1185 = vst [vmem:[%s238 + $0x40] sm:$0xf] %v1153
      %1186 = vst [vmem:[%s238 + $0x44] sm:$0xf] %v1154
      %1187 = vst [vmem:[%s238 + $0x48] sm:$0xf] %v1155
      %1188 = vst [vmem:[%s238 + $0x4c] sm:$0xf] %v1156
      %1189 = vst [vmem:[%s238 + $0x50] sm:$0xf] %v1157
      %1190 = vst [vmem:[%s238 + $0x54] sm:$0xf] %v1158
      %1191 = vst [vmem:[%s238 + $0x58] sm:$0xf] %v1159
      %1192 = vst [vmem:[%s238 + $0x5c] sm:$0xf] %v1160
      %1193 = vst [vmem:[%s238 + $0x60] sm:$0xf] %v1161
      %1194 = vst [vmem:[%s238 + $0x64] sm:$0xf] %v1162
      %1195 = vst [vmem:[%s238 + $0x68] sm:$0xf] %v1163
      %1196 = vst [vmem:[%s238 + $0x6c] sm:$0xf] %v1164
      %1197 = vst [vmem:[%s238 + $0x70] sm:$0xf] %v1165
      %1198 = vst [vmem:[%s238 + $0x74] sm:$0xf] %v1166
      %1199 = vst [vmem:[%s238 + $0x78] sm:$0xf] %v1167
      %1200 = vst [vmem:[%s238 + $0x7c] sm:$0xf] %v1168
      %s1201 = smul.u32 32, %s21
      %p1202 = scmp.lt.s32.totalorder %s19, 1
      %s1203 = scalar_select %p1202, %s19, 1
      %p1204 = scmp.lt.s32.totalorder %s1201, 63
      %s1205 = scalar_select %p1204, %s1201, 63
      %p1206 = scmp.lt.s32.totalorder %s20, 0
      %s1207 = scalar_select %p1206, %s20, 0
      %s1208 = sadd.s32 %s1207, %s1205
      %s1209 = smul.addr %s1203, 64
      %s1210 = sadd.s32 %s1208, %s1209
      %s1211 = smul.addr %s1210, 4
      %s1212 = scalar_lea.vmem %s3, %s1211
      // Predicated region
      $region33: #{conv_bn_relu.1} parent=31 // pred_check
        %p1213 = pneg %p133
      $region34: #{conv_bn_relu.1} parent=31 // pred_check_branch
        %1215 = sbr.rel (%p1213) target = $region36
      $region35: #{conv_bn_relu.1} parent=31 // pred_region
        %s1216 = smul.u32 32, %s21
      $region36: #{conv_bn_relu.1} parent=31 // pred_fallthru
        _
    $region32: #{conv_bn_relu.1} parent=5 // pred_fallthru
      _
    %p1217 = scmp.le.s32.totalorder 2, %s9
    // Predicated region
    $region37: #{conv_bn_relu.1} parent=5 // pred_check
      %p1218 = pneg %p1217
    $region38: #{conv_bn_relu.1} parent=5 // pred_check_branch
      %1220 = sbr.rel (%p1218) target = $region40
    $region39: #{conv_bn_relu.1} parent=5 // pred_region
      %s1221 = ssub.s32 %s9, 2
      // Predicated region
      $region41: #{conv_bn_relu.1} parent=39 // pred_check
        %p1222 = pneg %p139
      $region42: #{conv_bn_relu.1} parent=39 // pred_check_branch
        %1224 = sbr.rel (%p1222) target = $region44
      $region43: #{conv_bn_relu.1} parent=39 // pred_region
        %s1225 = smul.u32 32, %s24
        %p1226 = scmp.lt.s32.totalorder %s22, 1
        %s1227 = scalar_select %p1226, %s22, 1
        %p1228 = scmp.lt.s32.totalorder %s1225, 63
        %s1229 = scalar_select %p1228, %s1225, 63
        %p1230 = scmp.lt.s32.totalorder %s23, 0
        %s1231 = scalar_select %p1230, %s23, 0
        %s1232 = sadd.s32 %s1231, %s1229
        %s1233 = smul.addr %s1227, 64
        %s1234 = sadd.s32 %s1232, %s1233
        %s1235 = smul.addr %s1234, 4
        %s1236 = scalar_lea.vmem %s3, %s1235
      $region44: #{conv_bn_relu.1} parent=39 // pred_fallthru
        _
    $region40: #{conv_bn_relu.1} parent=5 // pred_fallthru
      _
  $region6: #{conv_bn_relu.1} parent=0 // loop_footer
    %s13 = sadd.s32 1, %s9
  $region7: #{conv_bn_relu.1} parent=0 // loop_footer_branch
    %8 = sbr.rel target = $region3
  $region8: #{conv_bn_relu.1} parent=0 // loop_exit
    _

</llo_original>
